<compile_context>
chip_gen: v7x
topology: tpu7x:2x2x1
jax: 0.10.0
libtpu: 0.0.40
codegen_flags: <defaults>
</compile_context>

<pallas_src>
import math

import jax
import jax.numpy as jnp
from jax.experimental import pallas as pl
from jax.experimental.pallas import tpu as pltpu


def _layer_scale_kernel(x_ref, gamma_ref, o_ref):
    # x_ref: (tile_rows, col_tile), gamma_ref: (1, col_tile) -> VPU broadcast
    # multiply; gamma's row-block index is constant so it stays VMEM-resident.
    o_ref[...] = (x_ref[...] * gamma_ref[...]).astype(o_ref.dtype)


def _cdiv(a: int, b: int) -> int:
    return -(-a // b)


def _round_up(a: int, b: int) -> int:
    return _cdiv(a, b) * b


def _vmem_capacity_bytes() -> int:
    try:
        info = pltpu.get_tpu_info()
        for name in ("vmem_capacity_bytes", "vmem_bytes", "vmem_size_bytes"):
            v = getattr(info, name, None)
            if v:
                return int(v)
    except Exception:
        pass
    return 64 << 20  # conservative (v7x-class) fallback


def _hw_profile():
    cap = _vmem_capacity_bytes()
    if cap <= (64 << 20):
        # v7x-class: 64 MiB VMEM, ~3.2 TB/s HBM -> bigger blocks, tighter budget.
        return {"vmem_budget": 20 << 20, "vmem_limit": 32 << 20,
                "target_in_bytes": 6 << 20}
    # v5e / v6e: 128 MiB VMEM.
    return {"vmem_budget": 32 << 20, "vmem_limit": 48 << 20,
            "target_in_bytes": 4 << 20}


def layer_scale(
    x: jax.Array,
    gamma: jax.Array,
    *,
    out_dtype=None,
    min_pallas_bytes: int = 256 * 1024,
) -> jax.Array:
    """Pallas LayerScale: returns x * gamma, gamma shape (dim,)."""
    orig_shape = x.shape
    dim = orig_shape[-1]
    assert gamma.shape == (dim,), f"gamma must have shape ({dim},), got {gamma.shape}"

    # Match PyTorch's type promotion for `x * gamma` by default; callers may
    # pass out_dtype=x.dtype to avoid promoted (wider) output writes.
    if out_dtype is None:
        out_dtype = jnp.result_type(x.dtype, gamma.dtype)

    in_bytes = jnp.dtype(x.dtype).itemsize
    out_bytes = jnp.dtype(out_dtype).itemsize
    gamma_bytes = jnp.dtype(gamma.dtype).itemsize
    per_elem = in_bytes + out_bytes
    total_bytes = x.size * per_elem

    # --- Tiny-input fallback: launch overhead >> data movement ---------------
    if total_bytes < min_pallas_bytes:
        return (x * gamma).astype(out_dtype)

    hw = _hw_profile()

    x2 = x.reshape(-1, dim)  # (rows, dim), dim on the lane axis
    rows = x2.shape[0]

    # --- Lane-dense fold for small channel dims (dim < 128) ------------------
    fold = 1
    if dim < 128:
        fold = 128 // math.gcd(dim, 128)
    padded = False
    if fold > 1:
        rem = rows % fold
        if rem:
            # Pad < fold rows so the contiguous fold-reshape is legal.
            x2 = jnp.pad(x2, ((0, fold - rem), (0, 0)))
            padded = True
        lane_dim = dim * fold
        rows_k = x2.shape[0] // fold
        x2 = x2.reshape(rows_k, lane_dim)          # pack `fold` rows per lane row
        g2 = jnp.tile(gamma.reshape(1, dim), (1, fold))
    else:
        lane_dim = dim
        rows_k = rows
        g2 = gamma.reshape(1, dim)

    # --- Tile selection -------------------------------------------------------
    # Sublane packing: f32 -> 8, bf16/f16 -> 16, int8/fp8 -> 32.
    pack = 8 * max(1, 4 // min(in_bytes, out_bytes))
    budget = hw["vmem_budget"]

    def footprint(tr, tc):  # double-buffered in + out slabs + gamma
        return 2 * tr * tc * per_elem + 2 * tc * gamma_bytes

    # Column (lane) tiling guard: only kicks in for extremely wide lane_dim,
    # keeps even a pack-row slab inside the VMEM budget.
    col_tile = lane_dim
    if footprint(pack, lane_dim) > budget:
        col_tile = max(128, (budget // (2 * pack * per_elem)) // 128 * 128)
        col_tile = min(col_tile, max(128, (lane_dim // 128) * 128))

    # Row tile sized by bytes (~target_in_bytes of input per block), then
    # clamped so the double-buffered footprint stays within the VMEM budget.
    tile = max(pack, (hw["target_in_bytes"] // (col_tile * in_bytes)) // pack * pack)
    row_cap = (budget - 2 * col_tile * gamma_bytes) // (2 * col_tile * per_elem)
    tile = min(tile, max(pack, row_cap // pack * pack))

    if tile >= rows_k:
        if total_bytes > (1 << 20) and rows_k > pack:
            # Force >=2 grid steps: output writeback of block i overlaps the
            # input fetch of block i+1, and both v7x TCs get a share.
            tile = max(pack, _round_up(_cdiv(rows_k, 2), pack))
        else:
            tile = rows_k  # full-extent row block (always layout-legal)

    n_row_blocks = _cdiv(rows_k, tile)
    if n_row_blocks > 2 and n_row_blocks % 2 == 1:
        # Prefer an even block count so the two v7x TensorCores stay balanced.
        alt = max(pack, _round_up(_cdiv(rows_k, n_row_blocks + 1), pack))
        if _cdiv(rows_k, alt) % 2 == 0:
            tile = alt
            n_row_blocks = _cdiv(rows_k, alt)

    grid = (n_row_blocks, _cdiv(lane_dim, col_tile))

    cost = pl.CostEstimate(
        flops=rows_k * lane_dim,
        transcendentals=0,
        bytes_accessed=rows_k * lane_dim * per_elem + lane_dim * gamma_bytes,
    )

    out = pl.pallas_call(
        _layer_scale_kernel,
        out_shape=jax.ShapeDtypeStruct((rows_k, lane_dim), out_dtype),
        grid_spec=pltpu.PrefetchScalarGridSpec(
            num_scalar_prefetch=0,
            grid=grid,
            in_specs=[
                pl.BlockSpec((tile, col_tile), lambda i, j: (i, j)),
                pl.BlockSpec((1, col_tile), lambda i, j: (0, j)),  # gamma resident
            ],
            out_specs=pl.BlockSpec((tile, col_tile), lambda i, j: (i, j)),
        ),
        compiler_params=pltpu.CompilerParams(
            dimension_semantics=("parallel", "parallel"),
            vmem_limit_bytes=hw["vmem_limit"],
        ),
        cost_estimate=cost,
    )(x2, g2)

    if fold > 1:
        out = out.reshape(rows_k * fold, dim)
        if padded:
            out = out[:rows]
    return out.reshape(orig_shape)


if __name__ == "__main__":
    key = jax.random.PRNGKey(0)
    init_values = 1e-5

    # --- Case A: module defaults, dim=32, x=[2, 8, 32] (tiny -> XLA fallback).
    batch, seq, dim = 2, 8, 32
    x = jax.random.normal(key, (batch, seq, dim), dtype=jnp.float32)
    gamma = init_values * jnp.ones((dim,), dtype=jnp.float32)  # nn.Parameter init
    y = layer_scale(x, gamma)
    jax.block_until_ready(y)
    y_ref = x * gamma
    assert y.shape == x.shape and y.dtype == y_ref.dtype
    assert jnp.allclose(y, y_ref, rtol=1e-6, atol=1e-6)

    # --- Case B: same tiny shape, Pallas path forced (lane-dense fold, dim=32).
    yb = layer_scale(x, gamma, min_pallas_bytes=0)
    jax.block_until_ready(yb)
    assert jnp.allclose(yb, y_ref, rtol=1e-6, atol=1e-6)

    # --- Case C: ragged row count -> fold with row padding.
    kc = jax.random.PRNGKey(1)
    xc = jax.random.normal(kc, (2, 37, 32), dtype=jnp.float32)
    yc = layer_scale(xc, gamma, min_pallas_bytes=0)
    jax.block_until_ready(yc)
    assert jnp.allclose(yc, xc * gamma, rtol=1e-6, atol=1e-6)

    # --- Case D: dim >= 128, odd rows, no fold, full-extent blocks.
    kd = jax.random.PRNGKey(2)
    xd = jax.random.normal(kd, (3, 7, 160), dtype=jnp.float32)
    gd = init_values * jnp.ones((160,), dtype=jnp.float32)
    yd = layer_scale(xd, gd, min_pallas_bytes=0)
    jax.block_until_ready(yd)
    assert jnp.allclose(yd, xd * gd, rtol=1e-6, atol=1e-6)

    # --- Case E: bf16 activations with f32 gamma (PyTorch promotion -> f32 out).
    ke = jax.random.PRNGKey(3)
    xe = jax.random.normal(ke, (4, 64, 96), dtype=jnp.bfloat16)
    ge = init_values * jnp.ones((96,), dtype=jnp.float32)
    ye = layer_scale(xe, ge, min_pallas_bytes=0)
    jax.block_until_ready(ye)
    ye_ref = xe * ge
    assert ye.dtype == ye_ref.dtype
    assert jnp.allclose(ye, ye_ref, rtol=1e-3, atol=1e-8)

    # --- Case F: multi-block pipelined grid (~2 MiB input, >=2 even steps).
    kf = jax.random.PRNGKey(4)
    xf = jax.random.normal(kf, (4, 512, 256), dtype=jnp.float32)
    gf = init_values * jnp.ones((256,), dtype=jnp.float32)
    yf = layer_scale(xf, gf)
    jax.block_until_ready(yf)
    assert jnp.allclose(yf, xf * gf, rtol=1e-6, atol=1e-6)

    print("KERNEL_OK")
</pallas_src>

<mosaic_0001>
module attributes {stable_mosaic.version = 11 : i64} {
  func.func @_layer_scale_kernel(%arg0: i32, %arg1: i32, %arg2: memref<4x128xf32, #tpu.memory_space<vmem>>, %arg3: memref<1x128xf32, #tpu.memory_space<vmem>>, %arg4: memref<4x128xf32, #tpu.memory_space<vmem>>) attributes {dimension_semantics = [#tpu.dimension_semantics<parallel>, #tpu.dimension_semantics<parallel>], iteration_bounds = array<i64: 1, 1>, scalar_prefetch = 0 : i64, scratch_operands = 0 : i64, tpu.core_type = #tpu.core_type<tc>, window_params = [{transform_indices = @transform_0, window_bounds = array<i64: 4, 128>}, {transform_indices = @transform_1, window_bounds = array<i64: 1, 128>}, {transform_indices = @transform_2, window_bounds = array<i64: 4, 128>}]} {
    %c0 = arith.constant 0 : index
    %c0_0 = arith.constant 0 : index
    %0 = vector.load %arg2[%c0, %c0_0] : memref<4x128xf32, #tpu.memory_space<vmem>>, vector<4x128xf32>
    %c0_1 = arith.constant 0 : index
    %c0_2 = arith.constant 0 : index
    %1 = vector.load %arg3[%c0_1, %c0_2] : memref<1x128xf32, #tpu.memory_space<vmem>>, vector<1x128xf32>
    %2 = vector.broadcast %1 : vector<1x128xf32> to vector<4x128xf32>
    %3 = arith.mulf %0, %2 : vector<4x128xf32>
    %c0_3 = arith.constant 0 : index
    %c0_4 = arith.constant 0 : index
    %4 = vector.load %arg4[%c0_3, %c0_4] : memref<4x128xf32, #tpu.memory_space<vmem>>, vector<4x128xf32>
    tpu.vector_store %arg4[%c0_3, %c0_4], %3 {strides = array<i32>} : memref<4x128xf32, #tpu.memory_space<vmem>>, vector<4x128xf32>,
    return
  }
  func.func @transform_0(%arg0: i32, %arg1: i32) -> (i32, i32) {
    %c0_i32 = arith.constant 0 : i32
    return %arg0, %arg1 : i32, i32
  }
  func.func @transform_1(%arg0: i32, %arg1: i32) -> (i32, i32) {
    %c0_i32 = arith.constant 0 : i32
    %c0_i32_0 = arith.constant 0 : i32
    return %c0_i32, %arg1 : i32, i32
  }
  func.func @transform_2(%arg0: i32, %arg1: i32) -> (i32, i32) {
    %c0_i32 = arith.constant 0 : i32
    return %arg0, %arg1 : i32, i32
  }
}

</mosaic_0001>

<llo_original>
// kernel: tpu_custom_call.1
$region0: #{tpu_custom_call.1}
  #allocation0 [shape = 'u32[]', space=smem, size = 0x4, offset = 0x4, fixed_abs, tag = 'smem constant byte address 0x4 - core index']
  #allocation1 [shape = 'u32[144,128]{1,0:T(1,128)}', space=vmem, size = 0x12000, scoped, tag = 'internal scratch']
  %s0 = inlined_call_operand.hbm [shape: f32[4,128], index: 0, kind: input, shape index: {}]
  %s1 = inlined_call_operand.vmem [shape: f32[1,128], index: 1, kind: input, shape index: {}]
  %s2 = inlined_call_operand.hbm [shape: f32[4,128], index: 2, kind: output, shape index: {}]
  %s3 = sld [smem:[#allocation0]]
  $region22: #{tpu_custom_call.1} parent=0
    _
  %s5 = ssub.s32 1, %s3
  %s6 = scalar_select 0, %s5, %s3
  $region1: #{tpu_custom_call.1} parent=0
    #allocation2 [shape = 'u8[2048]{0}', space=vmem, size = 0x800, scoped, tag = 'input window, operand 0, single buffered']
    #allocation3 [shape = 's32[1]{0}', space=sflag, size = 0x4, scoped, tag = 'scoped memory for tpu_custom_call.1']
    #allocation4 [shape = 's32[1]{0}', space=sflag, size = 0x4, scoped, tag = 'scoped memory for tpu_custom_call.1']
    #allocation5 [shape = 'u8[2048]{0}', space=vmem, size = 0x800, scoped, tag = 'output window, operand 0, single buffered']
    %7 = vsyncpa [#allocation3], 0
    %8 = vsyncpa [#allocation4], 0
    // Predicated region
    $region2: #{tpu_custom_call.1} parent=1 // pred_check
      _
    $region3: #{tpu_custom_call.1} parent=1 // pred_check_branch
      %10 = sbr.rel (0) target = $region5
    $region4: #{tpu_custom_call.1} parent=1 // pred_region
      %s12 = ssub.s32 64, 64
      %13 = vsyncadd [#allocation3], %s12
      %s15 = sshll.u32 [#allocation2], 4
      %s16 = int_to_ptr.vmem [resolvable:$true] %s15
      %18 = dma.hbm_to_vmem [thread:$0]  %s0, 64, %s16, [#allocation3]
    $region5: #{tpu_custom_call.1} parent=1 // pred_fallthru
      _
    // Predicated region
    $region6: #{tpu_custom_call.1} parent=1 // pred_check
      _
    $region7: #{tpu_custom_call.1} parent=1 // pred_check_branch
      %20 = sbr.rel (0) target = $region9
    $region8: #{tpu_custom_call.1} parent=1 // pred_region
      _
    $region9: #{tpu_custom_call.1} parent=1 // pred_fallthru
      _
    // Predicated region
    $region10: #{tpu_custom_call.1} parent=1 // pred_check
      _
    $region11: #{tpu_custom_call.1} parent=1 // pred_check_branch
      %22 = sbr.rel (0) target = $region13
    $region12: #{tpu_custom_call.1} parent=1 // pred_region
      %23 = dma.done [#allocation3], 64
    $region13: #{tpu_custom_call.1} parent=1 // pred_fallthru
      _
    %v24 = vld [vmem:[#allocation2] sm:$0xf]
    %v25 = vld [vmem:[%s1] sm:$0x1]
    %v27 = vlaneseq
    %v28 = vshrl.u32 %v27, 7
    %v29 = vsub.s32 0, %v28
    %v30 = vrot.slane %v25, %v29
    %v32 = vmul.f32 %v24, %v30
    %33 = vst [vmem:[#allocation5] sm:$0xf] %v32
    // Predicated region
    $region14: #{tpu_custom_call.1} parent=1 // pred_check
      _
    $region15: #{tpu_custom_call.1} parent=1 // pred_check_branch
      %35 = sbr.rel (0) target = $region17
    $region16: #{tpu_custom_call.1} parent=1 // pred_region
      %s37 = ssub.s32 64, 64
      %38 = vsyncadd [#allocation4], %s37
      %s40 = sshll.u32 [#allocation5], 4
      %s41 = int_to_ptr.vmem [resolvable:$true] %s40
      %43 = dma.vmem_to_hbm [thread:$0]  %s41, 64, %s2, [#allocation4]
    $region17: #{tpu_custom_call.1} parent=1 // pred_fallthru
      _
    // Predicated region
    $region18: #{tpu_custom_call.1} parent=1 // pred_check
      _
    $region19: #{tpu_custom_call.1} parent=1 // pred_check_branch
      %45 = sbr.rel (0) target = $region21
    $region20: #{tpu_custom_call.1} parent=1 // pred_region
      %46 = dma.done [#allocation4], 64
    $region21: #{tpu_custom_call.1} parent=1 // pred_fallthru
      _
    %47 = vsyncpa [#allocation3], 1
    %48 = vsyncpa [#allocation4], 1

</llo_original>
